<compile_context>
chip_gen: v5e
topology: v5e:2x2
jax: 0.10.0
libtpu: 0.0.40
codegen_flags: <defaults>
</compile_context>

<pallas_src>
import jax
import jax.numpy as jnp
from jax.experimental import pallas as pl
from jax.experimental.pallas import tpu as pltpu

LANES = 128


def _round_up(x, m):
    return (x + m - 1) // m * m


def _device_kind():
    try:
        return jax.devices()[0].device_kind.lower()
    except Exception:
        return ""


def _num_tensorcores():
    # v7x exposes 2 TensorCores per chip; v5e / v6e expose 1.
    return 2 if "v7" in _device_kind() else 1


def _col_block_max():
    # v7x: bigger blocks amortize the fixed per-step pipeline cost its 3.2 TB/s
    # HBM exposes; ~13 MB double-buffered stays under the 32 MiB scoped limit.
    # v5e/v6e: 8192 keeps double-buffered inputs well under v5e's 16 MiB.
    return 16384 if "v7" in _device_kind() else 8192


def _keypoint_loss_small_kernel(dx_ref, dy_ref, m_ref, inv_a_ref, inv_s_ref,
                                out_ref):
    """Single-step fast path: whole problem in one (nkpt, n) slab."""
    dx = dx_ref[...].astype(jnp.float32)
    dy = dy_ref[...].astype(jnp.float32)
    m = m_ref[...].astype(jnp.float32)

    d = dx * dx + dy * dy                                   # (nkpt, n)
    e = (d * inv_s_ref[...]) * inv_a_ref[...]               # (nkpt, n)
    loss_sum = jnp.sum((1.0 - jnp.exp(-e)) * m)
    nnz = jnp.sum((m != 0.0).astype(jnp.float32))

    # Single lane-dense (8,128) output block; partials land in [0,0] / [0,1].
    row = jax.lax.broadcasted_iota(jnp.int32, out_ref.shape, 0)
    col = jax.lax.broadcasted_iota(jnp.int32, out_ref.shape, 1)
    out_ref[...] = jnp.where(
        (row == 0) & (col == 0), loss_sum,
        jnp.where((row == 0) & (col == 1), nnz, 0.0))


def _keypoint_loss_stream_kernel(dx_ref, dy_ref, m_ref, inv_a_ref, inv_s_ref,
                                 out_ref, acc_loss_ref, acc_nz_ref):
    """Streaming path: grid = (core_split, column_blocks)."""
    i = pl.program_id(1)

    @pl.when(i == 0)
    def _():
        acc_loss_ref[...] = jnp.zeros_like(acc_loss_ref)
        acc_nz_ref[...] = jnp.zeros_like(acc_nz_ref)

    dx = dx_ref[...].astype(jnp.float32)
    dy = dy_ref[...].astype(jnp.float32)
    m = m_ref[...].astype(jnp.float32)

    d = dx * dx + dy * dy                                   # (nkpt, cb)
    e = (d * inv_s_ref[...]) * inv_a_ref[...]               # (nkpt, cb)
    term = (1.0 - jnp.exp(-e)) * m                          # (nkpt, cb)
    nz = (m != 0.0).astype(jnp.float32)                     # (nkpt, cb)

    # Fold the keypoint (sublane) axis per step on the otherwise-idle XLU so
    # the accumulator read-modify-write stores one row per 128 lanes instead
    # of the full (nkpt, cb) slab (v5e has a single vector-store slot).
    acc_loss_ref[...] += jnp.sum(term, axis=0, keepdims=True)   # (1, cb)
    acc_nz_ref[...] += jnp.sum(nz, axis=0, keepdims=True)       # (1, cb)

    @pl.when(i == pl.num_programs(1) - 1)
    def _():
        # One final cross-lane reduction per core; per-core (8,128) out block.
        loss_sum = jnp.sum(acc_loss_ref[...])
        nnz_sum = jnp.sum(acc_nz_ref[...])
        row = jax.lax.broadcasted_iota(jnp.int32, out_ref.shape, 0)
        col = jax.lax.broadcasted_iota(jnp.int32, out_ref.shape, 1)
        out_ref[...] = jnp.where(
            (row == 0) & (col == 0), loss_sum,
            jnp.where((row == 0) & (col == 1), nnz_sum, 0.0))


def keypoint_loss(pred_kpts, gt_kpts, kpt_mask, area, sigmas):
    """Functional forward of KeypointLoss(sigmas)(pred_kpts, gt_kpts, kpt_mask, area)."""
    n, nkpt = kpt_mask.shape
    total = float(n * nkpt)  # sum(mask != 0) + sum(mask == 0) == numel(mask)

    # Lane-dense (nkpt, N) relayout with the cheap prep fused into the copies
    # XLA materializes anyway (transpose+sub, reshape+reciprocal).  Native
    # dtypes are kept for the big streams; the kernel casts to f32.
    dx = (pred_kpts[..., 0] - gt_kpts[..., 0]).T                      # (nkpt, n)
    dy = (pred_kpts[..., 1] - gt_kpts[..., 1]).T                      # (nkpt, n)
    m = kpt_mask.T                                                    # (nkpt, n)
    inv_a = 1.0 / (2.0 * (jnp.reshape(area, (1, n)).astype(jnp.float32) + 1e-9))
    sig = jnp.reshape(sigmas, (nkpt, 1)).astype(jnp.float32)
    inv_s = 1.0 / ((2.0 * sig) ** 2)                                  # (nkpt, 1)

    cb_max = _col_block_max()

    if n <= cb_max:
        # ---- Small-N fast path: one step, no padding, no scratch, no phases.
        partials = pl.pallas_call(
            _keypoint_loss_small_kernel,
            out_shape=jax.ShapeDtypeStruct((8, LANES), jnp.float32),
        )(dx, dy, m, inv_a, inv_s)
        loss_sum = partials[0, 0]
        nnz = partials[0, 1]
    else:
        # ---- Streaming path.
        ncores = _num_tensorcores()
        nblocks = pl.cdiv(n, cb_max)
        if ncores > 1 and nblocks >= 2:
            nblocks = _round_up(nblocks, ncores)
        else:
            ncores = 1
        col_block = _round_up(pl.cdiv(n, nblocks), LANES)
        n_pad = nblocks * col_block
        grid_inner = nblocks // ncores

        # Zero padding is exact: padded inv_a == 0 forces e == 0 and padded
        # mask == 0 kills both the loss term and the nonzero count; `total`
        # below always uses the unpadded element count.
        pad = n_pad - n
        if pad:
            pad2 = ((0, 0), (0, pad))
            dx = jnp.pad(dx, pad2)
            dy = jnp.pad(dy, pad2)
            m = jnp.pad(m, pad2)
            inv_a = jnp.pad(inv_a, pad2)

        data_spec = pl.BlockSpec((nkpt, col_block),
                                 lambda c, i: (0, c * grid_inner + i))
        area_spec = pl.BlockSpec((1, col_block),
                                 lambda c, i: (0, c * grid_inner + i))
        sig_spec = pl.BlockSpec((nkpt, 1), lambda c, i: (0, 0))
        out_spec = pl.BlockSpec((8, LANES), lambda c, i: (c, 0))

        if ncores > 1:
            # v7x only: really shard the leading axis across the 2 TensorCores.
            # TODO(synk): verify per-core scratch/output isolation on real v7x.
            dim_sem = (pltpu.CORE_PARALLEL, pltpu.ARBITRARY)
        else:
            dim_sem = (pltpu.ARBITRARY, pltpu.ARBITRARY)

        partials = pl.pallas_call(
            _keypoint_loss_stream_kernel,
            out_shape=jax.ShapeDtypeStruct((ncores * 8, LANES), jnp.float32),
            grid=(ncores, grid_inner),
            in_specs=[data_spec, data_spec, data_spec, area_spec, sig_spec],
            out_specs=out_spec,
            scratch_shapes=[pltpu.VMEM((1, col_block), jnp.float32),
                            pltpu.VMEM((1, col_block), jnp.float32)],
            compiler_params=pltpu.CompilerParams(dimension_semantics=dim_sem),
        )(dx, dy, m, inv_a, inv_s)

        parts = partials.reshape(ncores, 8, LANES)
        loss_sum = jnp.sum(parts[:, 0, 0])
        nnz = jnp.sum(parts[:, 0, 1])

    kpt_loss_factor = total / (nnz + 1e-9)
    return kpt_loss_factor * (loss_sum / total)


class KeypointLoss:
    """JAX/Pallas equivalent of the PyTorch KeypointLoss module."""

    def __init__(self, sigmas):
        self.sigmas = jnp.asarray(sigmas)

    def __call__(self, pred_kpts, gt_kpts, kpt_mask, area):
        return keypoint_loss(pred_kpts, gt_kpts, kpt_mask, area, self.sigmas)


def _keypoint_loss_ref(pred_kpts, gt_kpts, kpt_mask, area, sigmas):
    # Pure-JAX literal translation of the PyTorch forward, for verification.
    d = (pred_kpts[..., 0] - gt_kpts[..., 0]) ** 2 + (pred_kpts[..., 1] - gt_kpts[..., 1]) ** 2
    kpt_loss_factor = (jnp.sum(kpt_mask != 0) + jnp.sum(kpt_mask == 0)) / (jnp.sum(kpt_mask != 0) + 1e-9)
    e = d / (2 * sigmas) ** 2 / (area + 1e-9) / 2
    return kpt_loss_factor * ((1 - jnp.exp(-e)) * kpt_mask).mean()


def _make_inputs(key, n_inst, nkpt):
    k1, k2, k3, k4 = jax.random.split(key, 4)
    gt_kpts = jax.random.uniform(k1, (n_inst, nkpt, 3), dtype=jnp.float32)
    pred_kpts = gt_kpts + 0.05 * jax.random.normal(k2, (n_inst, nkpt, 3),
                                                   dtype=jnp.float32)
    kpt_mask = (jax.random.uniform(k3, (n_inst, nkpt)) > 0.3).astype(jnp.float32)
    area = jax.random.uniform(k4, (n_inst, 1), dtype=jnp.float32,
                              minval=0.5, maxval=2.0)
    return pred_kpts, gt_kpts, kpt_mask, area


if __name__ == "__main__":
    key = jax.random.PRNGKey(0)
    nkpt = 17  # 17 COCO keypoints (x, y, vis)
    # COCO OKS sigmas (what ultralytics passes for 17-keypoint pose).
    sigmas = jnp.array([.26, .25, .25, .35, .35, .79, .79, .72, .72, .62,
                        .62, 1.07, 1.07, .87, .87, .89, .89],
                       dtype=jnp.float32) / 10.0
    loss_mod = KeypointLoss(sigmas)

    # Small-N fast path (the realistic YOLO shape: 64 matched instances).
    ka, kb = jax.random.split(key)
    pred_kpts, gt_kpts, kpt_mask, area = _make_inputs(ka, 64, nkpt)
    out = jax.block_until_ready(loss_mod(pred_kpts, gt_kpts, kpt_mask, area))
    ref = _keypoint_loss_ref(pred_kpts, gt_kpts, kpt_mask, area, sigmas)
    assert jnp.allclose(out, ref, rtol=1e-4, atol=1e-6), (out, ref)

    # Streaming path (forces the tiled / accumulator code path on any chip).
    pred_kpts, gt_kpts, kpt_mask, area = _make_inputs(kb, 20000, nkpt)
    out = jax.block_until_ready(loss_mod(pred_kpts, gt_kpts, kpt_mask, area))
    ref = _keypoint_loss_ref(pred_kpts, gt_kpts, kpt_mask, area, sigmas)
    assert jnp.allclose(out, ref, rtol=2e-4, atol=1e-6), (out, ref)

    print("KERNEL_OK")
</pallas_src>

<mosaic_0001>
module attributes {stable_mosaic.version = 11 : i64} {
  func.func @_keypoint_loss_small_kernel(%arg0: memref<17x64xf32, #tpu.memory_space<vmem>>, %arg1: memref<17x64xf32, #tpu.memory_space<vmem>>, %arg2: memref<17x64xf32, #tpu.memory_space<vmem>>, %arg3: memref<1x64xf32, #tpu.memory_space<vmem>>, %arg4: memref<17x1xf32, #tpu.memory_space<vmem>>, %arg5: memref<8x128xf32, #tpu.memory_space<vmem>>) attributes {dimension_semantics = [], scalar_prefetch = 0 : i64, scratch_operands = 0 : i64, tpu.core_type = #tpu.core_type<tc>} {
    %c0 = arith.constant 0 : index
    %c0_0 = arith.constant 0 : index
    %0 = vector.load %arg0[%c0, %c0_0] : memref<17x64xf32, #tpu.memory_space<vmem>>, vector<17x64xf32>
    %c0_1 = arith.constant 0 : index
    %c0_2 = arith.constant 0 : index
    %1 = vector.load %arg1[%c0_1, %c0_2] : memref<17x64xf32, #tpu.memory_space<vmem>>, vector<17x64xf32>
    %c0_3 = arith.constant 0 : index
    %c0_4 = arith.constant 0 : index
    %2 = vector.load %arg2[%c0_3, %c0_4] : memref<17x64xf32, #tpu.memory_space<vmem>>, vector<17x64xf32>
    %3 = arith.mulf %0, %0 : vector<17x64xf32>
    %4 = arith.mulf %1, %1 : vector<17x64xf32>
    %5 = arith.addf %3, %4 : vector<17x64xf32>
    %c0_5 = arith.constant 0 : index
    %c0_6 = arith.constant 0 : index
    %6 = vector.load %arg4[%c0_5, %c0_6] : memref<17x1xf32, #tpu.memory_space<vmem>>, vector<17x1xf32>
    %7 = vector.broadcast %6 : vector<17x1xf32> to vector<17x64xf32>
    %8 = arith.mulf %5, %7 : vector<17x64xf32>
    %c0_7 = arith.constant 0 : index
    %c0_8 = arith.constant 0 : index
    %9 = vector.load %arg3[%c0_7, %c0_8] : memref<1x64xf32, #tpu.memory_space<vmem>>, vector<1x64xf32>
    %10 = vector.broadcast %9 : vector<1x64xf32> to vector<17x64xf32>
    %11 = arith.mulf %8, %10 : vector<17x64xf32>
    %cst = arith.constant 0.000000e+00 : f32
    %12 = vector.broadcast %cst : f32 to vector<17x64xf32>
    %13 = arith.subf %12, %11 : vector<17x64xf32>
    %14 = math.exp %13 : vector<17x64xf32>
    %cst_9 = arith.constant 1.000000e+00 : f32
    %15 = vector.broadcast %cst_9 : f32 to vector<17x64xf32>
    %16 = arith.subf %15, %14 : vector<17x64xf32>
    %17 = arith.mulf %16, %2 : vector<17x64xf32>
    %18 = vector.shape_cast %17 : vector<17x64xf32> to vector<1x17x64xf32>
    %cst_10 = arith.constant dense<0.000000e+00> : vector<1xf32>
    %19 = vector.multi_reduction <add>, %18, %cst_10 [1, 2] : vector<1x17x64xf32> to vector<1xf32>
    %20 = vector.shape_cast %19 : vector<1xf32> to vector<1x1x1xf32>
    %21 = vector.extract %20[0, 0, 0] : f32 from vector<1x1x1xf32>
    %cst_11 = arith.constant 0.000000e+00 : f32
    %22 = vector.broadcast %cst_11 : f32 to vector<17x64xf32>
    %23 = arith.cmpf one, %2, %22 : vector<17x64xf32>
    %24 = arith.extui %23 : vector<17x64xi1> to vector<17x64xi32>
    %25 = arith.sitofp %24 : vector<17x64xi32> to vector<17x64xf32>
    %26 = vector.shape_cast %25 : vector<17x64xf32> to vector<1x17x64xf32>
    %cst_12 = arith.constant dense<0.000000e+00> : vector<1xf32>
    %27 = vector.multi_reduction <add>, %26, %cst_12 [1, 2] : vector<1x17x64xf32> to vector<1xf32>
    %28 = vector.shape_cast %27 : vector<1xf32> to vector<1x1x1xf32>
    %29 = vector.extract %28[0, 0, 0] : f32 from vector<1x1x1xf32>
    %30 = tpu.iota {dimensions = array<i32: 0>} : vector<8x128xi32>
    %31 = tpu.iota {dimensions = array<i32: 1>} : vector<8x128xi32>
    %c0_i32 = arith.constant 0 : i32
    %32 = vector.broadcast %c0_i32 : i32 to vector<8x128xi32>
    %33 = arith.cmpi eq, %30, %32 : vector<8x128xi32>
    %c0_i32_13 = arith.constant 0 : i32
    %34 = vector.broadcast %c0_i32_13 : i32 to vector<8x128xi32>
    %35 = arith.cmpi eq, %31, %34 : vector<8x128xi32>
    %36 = arith.andi %33, %35 : vector<8x128xi1>
    %c0_i32_14 = arith.constant 0 : i32
    %37 = vector.broadcast %c0_i32_14 : i32 to vector<8x128xi32>
    %38 = arith.cmpi eq, %30, %37 : vector<8x128xi32>
    %c1_i32 = arith.constant 1 : i32
    %39 = vector.broadcast %c1_i32 : i32 to vector<8x128xi32>
    %40 = arith.cmpi eq, %31, %39 : vector<8x128xi32>
    %41 = arith.andi %38, %40 : vector<8x128xi1>
    %cst_15 = arith.constant 0.000000e+00 : f32
    %42 = vector.broadcast %29 : f32 to vector<8x128xf32>
    %43 = vector.broadcast %cst_15 : f32 to vector<8x128xf32>
    %44 = arith.select %41, %42, %43 : vector<8x128xi1>, vector<8x128xf32>
    %45 = vector.broadcast %21 : f32 to vector<8x128xf32>
    %46 = arith.select %36, %45, %44 : vector<8x128xi1>, vector<8x128xf32>
    %c0_16 = arith.constant 0 : index
    %c0_17 = arith.constant 0 : index
    %47 = vector.load %arg5[%c0_16, %c0_17] : memref<8x128xf32, #tpu.memory_space<vmem>>, vector<8x128xf32>
    tpu.vector_store %arg5[%c0_16, %c0_17], %46 {strides = array<i32>} : memref<8x128xf32, #tpu.memory_space<vmem>>, vector<8x128xf32>,
    return
  }
}

</mosaic_0001>

<llo_original>
// kernel: tpu_custom_call.1
$region0: #{tpu_custom_call.1}
  #allocation0 [shape = 'u32[]', space=smem, size = 0x4, offset = 0x4, fixed_abs, tag = 'smem constant byte address 0x4 - core index']
  #allocation1 [shape = 'u32[72,128]{1,0:T(1,128)}', space=vmem, size = 0x9000, scoped, tag = 'internal scratch']
  %s0 = inlined_call_operand.vmem [shape: f32[17,64], index: 0, kind: input, shape index: {}]
  %s1 = inlined_call_operand.hbm [shape: f32[17,64], index: 1, kind: input, shape index: {}]
  %s2 = inlined_call_operand.hbm [shape: f32[17,64], index: 2, kind: input, shape index: {}]
  %s3 = inlined_call_operand.vmem [shape: f32[1,64], index: 3, kind: input, shape index: {}]
  %s4 = inlined_call_operand.vmem [shape: f32[17,1], index: 4, kind: input, shape index: {}]
  %s5 = inlined_call_operand.hbm [shape: f32[8,128], index: 5, kind: output, shape index: {}]
  %s6 = sld [smem:[#allocation0]]
  $region38: #{tpu_custom_call.1} parent=0
    _
  %s8 = ssub.s32 1, %s6
  %s9 = scalar_select 0, %s8, %s6
  $region1: #{tpu_custom_call.1} parent=0
    #allocation2 [shape = 'u8[12288]{0}', space=vmem, size = 0x3000, scoped, tag = 'input window, operand 1, single buffered']
    #allocation3 [shape = 's32[1]{0}', space=sflag, size = 0x4, scoped, tag = 'scoped memory for tpu_custom_call.1']
    #allocation4 [shape = 's32[1]{0}', space=sflag, size = 0x4, scoped, tag = 'scoped memory for tpu_custom_call.1']
    #allocation5 [shape = 'u8[12288]{0}', space=vmem, size = 0x3000, scoped, tag = 'input window, operand 2, single buffered']
    #allocation6 [shape = 's32[1]{0}', space=sflag, size = 0x4, scoped, tag = 'scoped memory for tpu_custom_call.1']
    #allocation7 [shape = 'u8[4096]{0}', space=vmem, size = 0x1000, scoped, tag = 'output window, operand 0, single buffered']
    %10 = vsyncpa [#allocation3], 0
    %11 = vsyncpa [#allocation6], 0
    %12 = vsyncpa [#allocation4], 0
    // Predicated region
    $region2: #{tpu_custom_call.1} parent=1 // pred_check
      _
    $region3: #{tpu_custom_call.1} parent=1 // pred_check_branch
      %14 = sbr.rel (0) target = $region5
    $region4: #{tpu_custom_call.1} parent=1 // pred_region
      _
    $region5: #{tpu_custom_call.1} parent=1 // pred_fallthru
      _
    // Predicated region
    $region6: #{tpu_custom_call.1} parent=1 // pred_check
      _
    $region7: #{tpu_custom_call.1} parent=1 // pred_check_branch
      %16 = sbr.rel (0) target = $region9
    $region8: #{tpu_custom_call.1} parent=1 // pred_region
      %18 = vsyncadd [#allocation3], 0
      %s19 = sshll.u32 %s1, 4
      %s20 = int_to_ptr.hbm [resolvable:$true] %s19
      %s21 = sshll.u32 [#allocation2], 4
      %s22 = int_to_ptr.vmem [resolvable:$true] %s21
      %27 = dma.hbm_to_vmem [thread:$0]  %s20, 384, %s22, [#allocation3], 128, 128, 8
    $region9: #{tpu_custom_call.1} parent=1 // pred_fallthru
      _
    // Predicated region
    $region10: #{tpu_custom_call.1} parent=1 // pred_check
      _
    $region11: #{tpu_custom_call.1} parent=1 // pred_check_branch
      %29 = sbr.rel (0) target = $region13
    $region12: #{tpu_custom_call.1} parent=1 // pred_region
      %31 = vsyncadd [#allocation6], 0
      %s32 = sshll.u32 %s2, 4
      %s33 = int_to_ptr.hbm [resolvable:$true] %s32
      %s34 = sshll.u32 [#allocation5], 4
      %s35 = int_to_ptr.vmem [resolvable:$true] %s34
      %40 = dma.hbm_to_vmem [thread:$0]  %s33, 384, %s35, [#allocation6], 128, 128, 8
    $region13: #{tpu_custom_call.1} parent=1 // pred_fallthru
      _
    // Predicated region
    $region14: #{tpu_custom_call.1} parent=1 // pred_check
      _
    $region15: #{tpu_custom_call.1} parent=1 // pred_check_branch
      %42 = sbr.rel (0) target = $region17
    $region16: #{tpu_custom_call.1} parent=1 // pred_region
      _
    $region17: #{tpu_custom_call.1} parent=1 // pred_fallthru
      _
    // Predicated region
    $region18: #{tpu_custom_call.1} parent=1 // pred_check
      _
    $region19: #{tpu_custom_call.1} parent=1 // pred_check_branch
      %44 = sbr.rel (0) target = $region21
    $region20: #{tpu_custom_call.1} parent=1 // pred_region
      _
    $region21: #{tpu_custom_call.1} parent=1 // pred_fallthru
      _
    // Predicated region
    $region22: #{tpu_custom_call.1} parent=1 // pred_check
      _
    $region23: #{tpu_custom_call.1} parent=1 // pred_check_branch
      %46 = sbr.rel (0) target = $region25
    $region24: #{tpu_custom_call.1} parent=1 // pred_region
      %48 = dma.done [#allocation3], 384
    $region25: #{tpu_custom_call.1} parent=1 // pred_fallthru
      _
    // Predicated region
    $region26: #{tpu_custom_call.1} parent=1 // pred_check
      _
    $region27: #{tpu_custom_call.1} parent=1 // pred_check_branch
      %50 = sbr.rel (0) target = $region29
    $region28: #{tpu_custom_call.1} parent=1 // pred_region
      %52 = dma.done [#allocation6], 384
    $region29: #{tpu_custom_call.1} parent=1 // pred_fallthru
      _
    %v53 = vld [vmem:[%s0] sm:$0xff]
    %v54 = vld [vmem:[%s0 + $0x8] sm:$0xff]
    %v55 = vld [vmem:[%s0 + $0x10] sm:$0x1]
    %v56 = vld [vmem:[#allocation2] sm:$0xff]
    %v57 = vld [vmem:[#allocation2 + $0x8] sm:$0xff]
    %v58 = vld [vmem:[#allocation2 + $0x10] sm:$0x1]
    %v59 = vld [vmem:[#allocation5] sm:$0xff]
    %v60 = vld [vmem:[#allocation5 + $0x8] sm:$0xff]
    %v61 = vld [vmem:[#allocation5 + $0x10] sm:$0x1]
    %v62 = vmul.f32 %v53, %v53
    %v63 = vmul.f32 %v54, %v54
    %v64 = vmul.f32 %v55, %v55
    %v65 = vmul.f32 %v56, %v56
    %v66 = vmul.f32 %v57, %v57
    %v67 = vmul.f32 %v58, %v58
    %v68 = vadd.f32 %v62, %v65
    %v69 = vadd.f32 %v63, %v66
    %v70 = vadd.f32 %v64, %v67
    %v71 = vld [vmem:[%s4] sm:$0xff]
    %v72 = vld [vmem:[%s4 + $0x8] sm:$0xff]
    %v73 = vld [vmem:[%s4 + $0x10] sm:$0x1]
    %75 = vset.pattern.permute.xlu0 0
    %76 = vperm.xlu0 %75, %v71
    %v77 = vpop.permute.xlu0 %76
    %80 = vset.pattern.permute.xlu0 0
    %81 = vperm.xlu0 %80, %v72
    %v82 = vpop.permute.xlu0 %81
    %85 = vset.pattern.permute.xlu0 0
    %86 = vperm.xlu0 %85, %v73
    %v87 = vpop.permute.xlu0 %86
    %v89 = vmul.f32 %v68, %v77
    %v90 = vmul.f32 %v69, %v82
    %v91 = vmul.f32 %v70, %v87
    %v92 = vld [vmem:[%s3] sm:$0x1]
    %v94 = vperm.slane %v92, 0
    %v96 = vmul.f32 %v89, %v94
    %v97 = vmul.f32 %v90, %v94
    %v98 = vmul.f32 %v91, %v94
    %v99 = vsub.f32 0.0, %v96
    %v100 = vsub.f32 0.0, %v97
    %v101 = vsub.f32 0.0, %v98
    %v102 = vmul.f32 %v99, 1.442695
    %v103 = vpow.pop %v102
    %v104 = vmul.f32 %v100, 1.442695
    %v105 = vpow.pop %v104
    %v106 = vmul.f32 %v101, 1.442695
    %v107 = vpow.pop %v106
    %v108 = vsub.f32 1.0, %v103
    %v109 = vsub.f32 1.0, %v105
    %v110 = vsub.f32 1.0, %v107
    %v111 = vmul.f32 %v108, %v59
    %v112 = vmul.f32 %v109, %v60
    %v113 = vmul.f32 %v110, %v61
    %vm114 = vcmask 523264
    %v115 = vsel %vm114, %v111, 0.0
    %v116 = vsel %vm114, %v112, 0.0
    %v117 = vadd.f32 %v115, %v116
    %vm118 = vcmask 516096
    %v119 = vsel %vm118, %v113, 0.0
    %v120 = vadd.f32 %v117, %v119
    %121 = vadd.xlane.f32.xlu0 %v120
    %v122 = vpop.xlane.xlu0 %121
    %v123 = vrot.slane %v122, 4
    %v124 = vadd.f32 %v122, %v123
    %v125 = vrot.slane %v124, 2
    %v126 = vadd.f32 %v124, %v125
    %v127 = vrot.slane %v126, 1
    %v128 = vadd.f32 %v126, %v127
    %s129 = vtos %v128
    %vm130 = vcmp.ne.f32.partialorder %v59, 0.0
    %vm131 = vcmp.ne.f32.partialorder %v60, 0.0
    %vm132 = vcmp.ne.f32.partialorder %v61, 0.0
    %v133 = vsel %vm130, 1, 0
    %v134 = vsel %vm131, 1, 0
    %v135 = vsel %vm132, 1, 0
    %v136 = vcvt.s32.f32 %v133
    %v137 = vcvt.s32.f32 %v134
    %v138 = vcvt.s32.f32 %v135
    %v139 = vsel %vm114, %v136, 0.0
    %v140 = vsel %vm114, %v137, 0.0
    %v141 = vadd.f32 %v139, %v140
    %v142 = vsel %vm118, %v138, 0.0
    %v143 = vadd.f32 %v141, %v142
    %144 = vadd.xlane.f32.xlu0 %v143
    %v145 = vpop.xlane.xlu0 %144
    %v146 = vrot.slane %v145, 4
    %v147 = vadd.f32 %v145, %v146
    %v148 = vrot.slane %v147, 2
    %v149 = vadd.f32 %v147, %v148
    %v150 = vrot.slane %v149, 1
    %v151 = vadd.f32 %v149, %v150
    %s152 = vtos %v151
    %v153 = vlaneseq
    %v154 = vshrl.u32 %v153, 7
    %v155 = vlaneseq
    %v156 = vand.u32 %v155, 127
    %vm157 = vcmp.eq.s32.totalorder %v154, 0
    %vm158 = vcmp.eq.s32.totalorder %v156, 0
    %vm159 = vmand %vm157, %vm158
    %vm160 = vcmp.eq.s32.totalorder %v156, 1
    %vm161 = vmand %vm157, %vm160
    %v162 = vstv %s152
    %v163 = vsel %vm161, %v162, 0.0
    %v164 = vstv %s129
    %v165 = vsel %vm159, %v164, %v163
    %166 = vst [vmem:[#allocation7] sm:$0xff] %v165
    // Predicated region
    $region30: #{tpu_custom_call.1} parent=1 // pred_check
      _
    $region31: #{tpu_custom_call.1} parent=1 // pred_check_branch
      %168 = sbr.rel (0) target = $region33
    $region32: #{tpu_custom_call.1} parent=1 // pred_region
      %170 = vsyncadd [#allocation4], 0
      %s172 = sshll.u32 [#allocation7], 4
      %s173 = int_to_ptr.vmem [resolvable:$true] %s172
      %s174 = sshll.u32 %s5, 4
      %s175 = int_to_ptr.hbm [resolvable:$true] %s174
      %177 = dma.vmem_to_hbm [thread:$0]  %s173, 128, %s175, [#allocation4]
    $region33: #{tpu_custom_call.1} parent=1 // pred_fallthru
      _
    // Predicated region
    $region34: #{tpu_custom_call.1} parent=1 // pred_check
      _
    $region35: #{tpu_custom_call.1} parent=1 // pred_check_branch
      %179 = sbr.rel (0) target = $region37
    $region36: #{tpu_custom_call.1} parent=1 // pred_region
      %181 = dma.done [#allocation4], 128
    $region37: #{tpu_custom_call.1} parent=1 // pred_fallthru
      _
    %182 = vsyncpa [#allocation3], 1
    %183 = vsyncpa [#allocation6], 1
    %184 = vsyncpa [#allocation4], 1

</llo_original>
